<compile_context>
chip_gen: v7x
topology: tpu7x:2x2x1
jax: 0.10.0
libtpu: 0.0.40
codegen_flags: <defaults>
</compile_context>

<pallas_src>
import functools

import jax
import jax.numpy as jnp
import numpy as np
from jax.experimental import pallas as pl
from jax.experimental.pallas import tpu as pltpu

_LANES = 128
_SUBLANES = 8
_MAX_TILE_ROWS = 512            # 512*128*4 B = 256 KiB per input per pipeline buffer


def _make_kernel(threshold):
    thr = float(threshold)
    scale = thr ** 0.9          # threshold^0.9, folded at trace time

    def kernel(p_ref, g_ref, out_ref, acc_ref):
        k = pl.program_id(1)    # reduction (row-tile) axis

        @pl.when(k == 0)
        def _init():
            acc_ref[...] = jnp.zeros_like(acc_ref)

        d = g_ref[...] - p_ref[...]
        sq = d * d                              # masked squared error (mask folded in wrapper)
        acc_ref[...] += sq                      # per-element f32 accumulation (VPU only)

        # Smooth branch, gated per tile: only pay the EUP exp/log when some element
        # of this tile actually exceeds the threshold (the uncommon case).
        hit = jnp.max(sq) > thr

        @pl.when(hit)
        def _smooth():
            # diff**0.1 * thr**0.9 written as exp(0.1*log(.)) so it stays on the EUP.
            # Clamping the log argument to thr only touches lanes where the
            # correction is NOT selected, so results are unchanged for any thr > 0.
            smooth = jnp.exp(0.1 * jnp.log(jnp.maximum(sq, thr))) * scale
            acc_ref[...] += jnp.where(sq > thr, smooth - sq, 0.0)

        @pl.when(k == pl.num_programs(1) - 1)
        def _finalize():
            total = jnp.sum(acc_ref[...])       # single XLU reduce per core
            out_ref[...] = jnp.full(out_ref.shape, total, out_ref.dtype)

    return kernel


def _grid_layout(n):
    """Static tiling: (tile_rows, tiles_per_core, num_cores, total_rows)."""
    rows = max(_SUBLANES, pl.cdiv(n, _LANES))
    rows = pl.cdiv(rows, _SUBLANES) * _SUBLANES        # sublane-aligned
    tile_rows = min(_MAX_TILE_ROWS, rows)
    tiles = pl.cdiv(rows, tile_rows)
    num_cores = 2 if tiles >= 2 else 1                 # v7x: 2 TCs; harmless on v5e/v6e
    tiles_per_core = pl.cdiv(tiles, num_cores)
    total_rows = num_cores * tiles_per_core * tile_rows
    return tile_rows, tiles_per_core, num_cores, total_rows


@functools.partial(jax.jit, static_argnames=("threshold",))
def keypoints_mse_smooth_loss(keypoints_pred, keypoints_gt,
                              keypoints_binary_validity, threshold=400.0):
    B, J, D = keypoints_pred.shape
    n = B * J * D
    tile_rows, tiles_per_core, num_cores, total_rows = _grid_layout(n)
    padded = total_rows * _LANES

    v = keypoints_binary_validity.astype(jnp.float32)          # (B, J, 1)

    # Fold the binary mask into the operands (v*v == v for binary validity): the
    # kernel streams two f32 slabs instead of three.  Zero padding contributes 0.
    # TODO(synk): for very large keypoint sets, stream (B*J, D)-shaped inputs with
    # in-kernel tail masking instead of this pad-copy; negligible at keypoint scale.
    def pack(x):
        x = (x.astype(jnp.float32) * v).reshape(-1)
        x = jnp.pad(x, (0, padded - n))
        return x.reshape(total_rows, _LANES)

    in_spec = pl.BlockSpec(
        (tile_rows, _LANES),
        lambda i, k: (i * tiles_per_core + k, 0))
    out_spec = pl.BlockSpec((1, _SUBLANES, _LANES), lambda i, k: (i, 0, 0))

    partials = pl.pallas_call(
        _make_kernel(threshold),
        out_shape=jax.ShapeDtypeStruct((num_cores, _SUBLANES, _LANES), jnp.float32),
        grid=(num_cores, tiles_per_core),
        in_specs=[in_spec, in_spec],
        out_specs=out_spec,
        scratch_shapes=[pltpu.VMEM((tile_rows, _LANES), jnp.float32)],
        compiler_params=pltpu.CompilerParams(
            dimension_semantics=("parallel", "arbitrary")),
        cost_estimate=pl.CostEstimate(
            flops=8 * padded,
            transcendentals=2 * padded,
            bytes_accessed=2 * padded * 4 + num_cores * _SUBLANES * _LANES * 4),
    )(pack(keypoints_pred), pack(keypoints_gt))

    s_diff = jnp.sum(partials[:, 0, 0])                        # combine per-core partials
    # loss = sum(diff) / (D * max(1, sum(validity)))  -- denominator from the tiny
    # original validity array, on-device (no .item() host sync).
    denom = float(D) * jnp.maximum(1.0, jnp.sum(v))
    return s_diff / denom


def _reference_loss(keypoints_pred, keypoints_gt, keypoints_binary_validity,
                    threshold=400.0):
    # Faithful numpy port of the PyTorch forward (host-side, float64).
    pred = np.asarray(keypoints_pred, np.float64)
    gt = np.asarray(keypoints_gt, np.float64)
    vv = np.asarray(keypoints_binary_validity, np.float64)
    dim = pred.shape[-1]
    diff = (gt - pred) ** 2 * vv
    mask = diff > threshold
    diff[mask] = np.power(diff[mask], 0.1) * threshold ** 0.9
    return diff.sum() / (dim * max(1.0, vv.sum()))


if __name__ == "__main__":
    B, J, D = 2, 8, 3

    key = jax.random.PRNGKey(0)
    k1, k2, k3 = jax.random.split(key, 3)

    # Spread large enough that some squared errors exceed threshold=400,
    # exercising both the plain-MSE and the smooth (pow) branch.
    keypoints_gt = jax.random.uniform(k1, (B, J, D), jnp.float32, -30.0, 30.0)
    keypoints_pred = keypoints_gt + jax.random.uniform(
        k2, (B, J, D), jnp.float32, -40.0, 40.0)
    validity = jax.random.bernoulli(k3, 0.8, (B, J, 1)).astype(jnp.float32)

    # Case 1: mixed small/large errors (smooth branch active).
    loss = jax.block_until_ready(
        keypoints_mse_smooth_loss(keypoints_pred, keypoints_gt, validity,
                                  threshold=400.0))
    np.testing.assert_allclose(
        np.asarray(loss),
        _reference_loss(keypoints_pred, keypoints_gt, validity, 400.0),
        rtol=1e-4, atol=1e-6)

    # Case 2: only small errors — the gated exp/log branch must stay off.
    pred_small = keypoints_gt + 0.01 * (keypoints_pred - keypoints_gt)
    loss2 = jax.block_until_ready(
        keypoints_mse_smooth_loss(pred_small, keypoints_gt, validity,
                                  threshold=400.0))
    np.testing.assert_allclose(
        np.asarray(loss2),
        _reference_loss(pred_small, keypoints_gt, validity, 400.0),
        rtol=1e-4, atol=1e-6)

    # Case 3: all-invalid keypoints — denominator falls back to D * max(1, 0).
    zeros_v = jnp.zeros_like(validity)
    loss3 = jax.block_until_ready(
        keypoints_mse_smooth_loss(keypoints_pred, keypoints_gt, zeros_v,
                                  threshold=400.0))
    np.testing.assert_allclose(
        np.asarray(loss3),
        _reference_loss(keypoints_pred, keypoints_gt, zeros_v, 400.0),
        rtol=1e-4, atol=1e-6)

    print("KERNEL_OK")
</pallas_src>

<mosaic_0001>
module attributes {stable_mosaic.version = 11 : i64} {
  func.func @kernel(%arg0: i32, %arg1: i32, %arg2: memref<8x128xf32, #tpu.memory_space<vmem>>, %arg3: memref<8x128xf32, #tpu.memory_space<vmem>>, %arg4: memref<1x8x128xf32, #tpu.memory_space<vmem>>, %arg5: memref<8x128xf32, #tpu.memory_space<vmem>>) attributes {dimension_semantics = [#tpu.dimension_semantics<parallel>, #tpu.dimension_semantics<arbitrary>], iteration_bounds = array<i64: 1, 1>, scalar_prefetch = 0 : i64, scratch_operands = 1 : i64, tpu.core_type = #tpu.core_type<tc>, window_params = [{transform_indices = @transform_0, window_bounds = array<i64: 8, 128>}, {transform_indices = @transform_1, window_bounds = array<i64: 8, 128>}, {transform_indices = @transform_2, window_bounds = array<i64: 1, 8, 128>}]} {
    %c0_i32 = arith.constant 0 : i32
    %0 = arith.cmpi eq, %arg1, %c0_i32 : i32
    %1 = arith.extui %0 : i1 to i32
    %c0_i32_0 = arith.constant 0 : i32
    %2 = arith.cmpi ne, %1, %c0_i32_0 : i32
    scf.if %2 {
      %cst_12 = arith.constant 0.000000e+00 : f32
      %20 = vector.broadcast %cst_12 : f32 to vector<8x128xf32>
      %c0_13 = arith.constant 0 : index
      %c0_14 = arith.constant 0 : index
      %21 = vector.load %arg5[%c0_13, %c0_14] : memref<8x128xf32, #tpu.memory_space<vmem>>, vector<8x128xf32>
      tpu.vector_store %arg5[%c0_13, %c0_14], %20 {strides = array<i32>} : memref<8x128xf32, #tpu.memory_space<vmem>>, vector<8x128xf32>,
    } else {
    }
    %c0 = arith.constant 0 : index
    %c0_1 = arith.constant 0 : index
    %3 = vector.load %arg3[%c0, %c0_1] : memref<8x128xf32, #tpu.memory_space<vmem>>, vector<8x128xf32>
    %c0_2 = arith.constant 0 : index
    %c0_3 = arith.constant 0 : index
    %4 = vector.load %arg2[%c0_2, %c0_3] : memref<8x128xf32, #tpu.memory_space<vmem>>, vector<8x128xf32>
    %5 = arith.subf %3, %4 : vector<8x128xf32>
    %6 = arith.mulf %5, %5 : vector<8x128xf32>
    %c0_4 = arith.constant 0 : index
    %c0_5 = arith.constant 0 : index
    %7 = vector.load %arg5[%c0_4, %c0_5] : memref<8x128xf32, #tpu.memory_space<vmem>>, vector<8x128xf32>
    %8 = arith.addf %7, %6 : vector<8x128xf32>
    %c0_6 = arith.constant 0 : index
    %c0_7 = arith.constant 0 : index
    %9 = vector.load %arg5[%c0_6, %c0_7] : memref<8x128xf32, #tpu.memory_space<vmem>>, vector<8x128xf32>
    tpu.vector_store %arg5[%c0_6, %c0_7], %8 {strides = array<i32>} : memref<8x128xf32, #tpu.memory_space<vmem>>, vector<8x128xf32>,
    %10 = vector.shape_cast %6 : vector<8x128xf32> to vector<1x8x128xf32>
    %cst = arith.constant dense<0xFF800000> : vector<1xf32>
    %11 = vector.multi_reduction <maximumf>, %10, %cst [1, 2] : vector<1x8x128xf32> to vector<1xf32>
    %12 = vector.shape_cast %11 : vector<1xf32> to vector<1x1x1xf32>
    %13 = vector.extract %12[0, 0, 0] : f32 from vector<1x1x1xf32>
    %cst_8 = arith.constant 4.000000e+02 : f32
    %14 = arith.cmpf ogt, %13, %cst_8 : f32
    %15 = arith.extui %14 : i1 to i32
    %c0_i32_9 = arith.constant 0 : i32
    %16 = arith.cmpi ne, %15, %c0_i32_9 : i32
    scf.if %16 {
      %cst_12 = arith.constant 4.000000e+02 : f32
      %20 = vector.broadcast %cst_12 : f32 to vector<8x128xf32>
      %21 = arith.maximumf %6, %20 : vector<8x128xf32>
      %22 = math.log %21 : vector<8x128xf32>
      %cst_13 = arith.constant 1.000000e-01 : f32
      %23 = vector.broadcast %cst_13 : f32 to vector<8x128xf32>
      %24 = arith.mulf %23, %22 : vector<8x128xf32>
      %25 = math.exp %24 : vector<8x128xf32>
      %cst_14 = arith.constant 219.712112 : f32
      %26 = vector.broadcast %cst_14 : f32 to vector<8x128xf32>
      %27 = arith.mulf %25, %26 : vector<8x128xf32>
      %c0_15 = arith.constant 0 : index
      %c0_16 = arith.constant 0 : index
      %28 = vector.load %arg5[%c0_15, %c0_16] : memref<8x128xf32, #tpu.memory_space<vmem>>, vector<8x128xf32>
      %cst_17 = arith.constant 4.000000e+02 : f32
      %29 = vector.broadcast %cst_17 : f32 to vector<8x128xf32>
      %30 = arith.cmpf ogt, %6, %29 : vector<8x128xf32>
      %31 = arith.subf %27, %6 : vector<8x128xf32>
      %cst_18 = arith.constant 0.000000e+00 : f32
      %32 = vector.broadcast %cst_18 : f32 to vector<8x128xf32>
      %33 = arith.select %30, %31, %32 : vector<8x128xi1>, vector<8x128xf32>
      %34 = arith.addf %28, %33 : vector<8x128xf32>
      %c0_19 = arith.constant 0 : index
      %c0_20 = arith.constant 0 : index
      %35 = vector.load %arg5[%c0_19, %c0_20] : memref<8x128xf32, #tpu.memory_space<vmem>>, vector<8x128xf32>
      tpu.vector_store %arg5[%c0_19, %c0_20], %34 {strides = array<i32>} : memref<8x128xf32, #tpu.memory_space<vmem>>, vector<8x128xf32>,
    } else {
    }
    %c0_i32_10 = arith.constant 0 : i32
    %17 = arith.cmpi eq, %arg1, %c0_i32_10 : i32
    %18 = arith.extui %17 : i1 to i32
    %c0_i32_11 = arith.constant 0 : i32
    %19 = arith.cmpi ne, %18, %c0_i32_11 : i32
    scf.if %19 {
      %c0_12 = arith.constant 0 : index
      %c0_13 = arith.constant 0 : index
      %20 = vector.load %arg5[%c0_12, %c0_13] : memref<8x128xf32, #tpu.memory_space<vmem>>, vector<8x128xf32>
      %21 = vector.shape_cast %20 : vector<8x128xf32> to vector<1x8x128xf32>
      %cst_14 = arith.constant dense<0.000000e+00> : vector<1xf32>
      %22 = vector.multi_reduction <add>, %21, %cst_14 [1, 2] : vector<1x8x128xf32> to vector<1xf32>
      %23 = vector.shape_cast %22 : vector<1xf32> to vector<1x1x1xf32>
      %24 = vector.extract %23[0, 0, 0] : f32 from vector<1x1x1xf32>
      %25 = vector.broadcast %24 : f32 to vector<1x8x128xf32>
      %c0_15 = arith.constant 0 : index
      %c0_16 = arith.constant 0 : index
      %c0_17 = arith.constant 0 : index
      %26 = vector.load %arg4[%c0_15, %c0_16, %c0_17] : memref<1x8x128xf32, #tpu.memory_space<vmem>>, vector<1x8x128xf32>
      tpu.vector_store %arg4[%c0_15, %c0_16, %c0_17], %25 {strides = array<i32>} : memref<1x8x128xf32, #tpu.memory_space<vmem>>, vector<1x8x128xf32>,
    } else {
    }
    return
  }
  func.func @transform_0(%arg0: i32, %arg1: i32) -> (i32, i32) {
    %c1_i32 = arith.constant 1 : i32
    %0 = arith.muli %arg0, %c1_i32 : i32
    %1 = arith.addi %0, %arg1 : i32
    %c0_i32 = arith.constant 0 : i32
    %c0_i32_0 = arith.constant 0 : i32
    return %1, %c0_i32 : i32, i32
  }
  func.func @transform_1(%arg0: i32, %arg1: i32) -> (i32, i32) {
    %c1_i32 = arith.constant 1 : i32
    %0 = arith.muli %arg0, %c1_i32 : i32
    %1 = arith.addi %0, %arg1 : i32
    %c0_i32 = arith.constant 0 : i32
    %c0_i32_0 = arith.constant 0 : i32
    return %1, %c0_i32 : i32, i32
  }
  func.func @transform_2(%arg0: i32, %arg1: i32) -> (i32, i32, i32) {
    %c0_i32 = arith.constant 0 : i32
    %c0_i32_0 = arith.constant 0 : i32
    %c0_i32_1 = arith.constant 0 : i32
    return %arg0, %c0_i32, %c0_i32_0 : i32, i32, i32
  }
}

</mosaic_0001>

<llo_original>
// kernel: keypoints_mse_smooth_loss.1
$region0: #{keypoints_mse_smooth_loss.1}
  #allocation0 [shape = 'u32[]', space=smem, size = 0x4, offset = 0x4, fixed_abs, tag = 'smem constant byte address 0x4 - core index']
  #allocation1 [shape = 'u32[144,128]{1,0:T(1,128)}', space=vmem, size = 0x12000, scoped, tag = 'internal scratch']
  #allocation2 [shape = 'f32[8,128]{1,0:T(8,128)}', space=vmem, size = 0x1000, scoped, tag = 'scratch operand']
  %s0 = inlined_call_operand.vmem [shape: f32[8,128], index: 0, kind: input, shape index: {}]
  %s1 = inlined_call_operand.vmem [shape: f32[8,128], index: 1, kind: input, shape index: {}]
  %s2 = inlined_call_operand.vmem [shape: f32[1,8,128], index: 2, kind: output, shape index: {}]
  %s3 = sld [smem:[#allocation0]]
  $region30: #{keypoints_mse_smooth_loss.1} parent=0
    _
  %s5 = ssub.s32 1, %s3
  %s6 = scalar_select 0, %s5, %s3
  // Predicated region
  $region2: #{keypoints_mse_smooth_loss.1} parent=0 // pred_check
    _
  $region3: #{keypoints_mse_smooth_loss.1} parent=0 // pred_check_branch
    %8 = sbr.rel (0) target = $region5
  $region4: #{keypoints_mse_smooth_loss.1} parent=0 // pred_region
    %s9 = sadd.s32 0, 0
    %p10 = scmp.lt.s32.totalorder %s9, 0
    %s11 = scalar_select %p10, %s9, 0
    %s12 = smul.addr %s11, 8
    %s13 = scalar_lea.vmem %s0, %s12
    %s14 = sadd.s32 0, 0
  $region5: #{keypoints_mse_smooth_loss.1} parent=0 // pred_fallthru
    _
  // Predicated region
  $region6: #{keypoints_mse_smooth_loss.1} parent=0 // pred_check
    _
  $region7: #{keypoints_mse_smooth_loss.1} parent=0 // pred_check_branch
    %16 = sbr.rel (0) target = $region9
  $region8: #{keypoints_mse_smooth_loss.1} parent=0 // pred_region
    %s17 = sadd.s32 0, 0
    %p18 = scmp.lt.s32.totalorder %s17, 0
    %s19 = scalar_select %p18, %s17, 0
    %s20 = smul.addr %s19, 8
    %s21 = scalar_lea.vmem %s1, %s20
    %s22 = sadd.s32 0, 0
  $region9: #{keypoints_mse_smooth_loss.1} parent=0 // pred_fallthru
    _
  %s23 = sadd.s32 0, 0
  %p24 = scmp.lt.s32.totalorder %s23, 0
  %s25 = scalar_select %p24, %s23, 0
  %s26 = smul.addr %s25, 8
  %s27 = scalar_lea.vmem %s0, %s26
  %s28 = sadd.s32 0, 0
  %p29 = scmp.lt.s32.totalorder %s28, 0
  %s30 = scalar_select %p29, %s28, 0
  %s31 = smul.addr %s30, 8
  %s32 = scalar_lea.vmem %s1, %s31
  %s33 = sadd.s32 0, 0
  %p34 = scmp.lt.s32.totalorder %s33, 0
  %s35 = scalar_select %p34, %s33, 0
  %s36 = smul.addr %s35, 8
  %s37 = scalar_lea.vmem %s0, %s36
  %s38 = sadd.s32 0, 0
  %s39 = sadd.s32 0, 0
  %p40 = scmp.lt.s32.totalorder %s39, 0
  %s41 = scalar_select %p40, %s39, 0
  %s42 = smul.addr %s41, 8
  %s43 = scalar_lea.vmem %s1, %s42
  %s44 = sadd.s32 0, 0
  %p45 = scmp.eq.s32.totalorder 0, 0
  // Predicated region
  $region10: #{keypoints_mse_smooth_loss.1} parent=0 // pred_check
    %p46 = pneg %p45
  $region11: #{keypoints_mse_smooth_loss.1} parent=0 // pred_check_branch
    %48 = sbr.rel (%p46) target = $region13
  $region12: #{keypoints_mse_smooth_loss.1} parent=0 // pred_region
    %49 = vst [vmem:[#allocation2] sm:$0xff] 0.0
  $region13: #{keypoints_mse_smooth_loss.1} parent=0 // pred_fallthru
    _
  %v50 = vld [vmem:[%s43] sm:$0xff]
  %v51 = vld [vmem:[%s37] sm:$0xff]
  %v52 = vsub.f32 %v50, %v51
  %v53 = vmul.f32 %v52, %v52
  %v54 = vld [vmem:[#allocation2] sm:$0xff]
  %v55 = vadd.f32 %v54, %v53
  %56 = vst [vmem:[#allocation2] sm:$0xff] %v55
  %57 = vmax.xlane.f32.xlu0 %v53
  %v58 = vpop.xlane.xlu0 %57
  %v59 = vrot.slane %v58, 4
  %v60 = vmax.f32 %v58, %v59
  %v61 = vrot.slane %v60, 2
  %v62 = vmax.f32 %v60, %v61
  %v63 = vrot.slane %v62, 1
  %v64 = vmax.f32 %v62, %v63
  %s65 = vtos %v64
  %p66 = scmp.gt.f32.partialorder %s65, 400.0
  // Predicated region
  $region14: #{keypoints_mse_smooth_loss.1} parent=0 // pred_check
    %p67 = pneg %p66
  $region15: #{keypoints_mse_smooth_loss.1} parent=0 // pred_check_branch
    %69 = sbr.rel (%p67) target = $region17
  $region16: #{keypoints_mse_smooth_loss.1} parent=0 // pred_region
    %v70 = vmax.f32 %v53, 400.0
    %v71 = vlog2.pop %v70
    %v72 = vmul.f32 %v71, 0.6931472
    %v73 = vmul.f32 %v72, 0.1
    %v74 = vmul.f32 %v73, 1.442695
    %v75 = vpow.pop %v74
    %v76 = vmul.f32 %v75, 219.71211
    %v77 = vld [vmem:[#allocation2] sm:$0xff]
    %vm78 = vcmp.gt.f32.partialorder %v53, 400.0
    %v79 = vsub.f32 %v76, %v53
    %v80 = vsel %vm78, %v79, 0.0
    %v81 = vadd.f32 %v77, %v80
    %82 = vst [vmem:[#allocation2] sm:$0xff] %v81
  $region17: #{keypoints_mse_smooth_loss.1} parent=0 // pred_fallthru
    _
  // Predicated region
  $region18: #{keypoints_mse_smooth_loss.1} parent=0 // pred_check
    %p83 = pneg %p45
  $region19: #{keypoints_mse_smooth_loss.1} parent=0 // pred_check_branch
    %85 = sbr.rel (%p83) target = $region21
  $region20: #{keypoints_mse_smooth_loss.1} parent=0 // pred_region
    %v86 = vld [vmem:[#allocation2] sm:$0xff]
    %87 = vadd.xlane.f32.xlu0 %v86
    %v88 = vpop.xlane.xlu0 %87
    %v89 = vrot.slane %v88, 4
    %v90 = vadd.f32 %v88, %v89
    %v91 = vrot.slane %v90, 2
    %v92 = vadd.f32 %v90, %v91
    %v93 = vrot.slane %v92, 1
    %v94 = vadd.f32 %v92, %v93
    %s95 = vtos %v94
    %v96 = vstv %s95
    %97 = vst [vmem:[%s2] sm:$0xff] %v96
  $region21: #{keypoints_mse_smooth_loss.1} parent=0 // pred_fallthru
    _
  // Predicated region
  $region22: #{keypoints_mse_smooth_loss.1} parent=0 // pred_check
    _
  $region23: #{keypoints_mse_smooth_loss.1} parent=0 // pred_check_branch
    %99 = sbr.rel (0) target = $region25
  $region24: #{keypoints_mse_smooth_loss.1} parent=0 // pred_region
    _
  $region25: #{keypoints_mse_smooth_loss.1} parent=0 // pred_fallthru
    _
  // Predicated region
  $region26: #{keypoints_mse_smooth_loss.1} parent=0 // pred_check
    _
  $region27: #{keypoints_mse_smooth_loss.1} parent=0 // pred_check_branch
    %101 = sbr.rel (0) target = $region29
  $region28: #{keypoints_mse_smooth_loss.1} parent=0 // pred_region
    _
  $region29: #{keypoints_mse_smooth_loss.1} parent=0 // pred_fallthru
    _

</llo_original>
